<compile_context>
chip_gen: v7x
topology: tpu7x:2x2x1
jax: 0.10.0
libtpu: 0.0.40
codegen_flags: <defaults>
</compile_context>

<pallas_src>
import functools

import jax
import jax.numpy as jnp
from jax.experimental import pallas as pl
from jax.experimental.pallas import tpu as pltpu


def _round_up(n, m):
    return ((n + m - 1) // m) * m


def _mlp_kernel(n_hidden, out_dim, x_ref, *refs):
    """Fused MLP forward for one batch tile (transposed layout).

    x_ref:   (d_in, bt) bf16      -- batch on the lane axis
    refs:    (w0, b0, ..., w_last, b_last, out_ref)
             hidden W: (H_out, H_in) bf16, hidden b: (H_out, 1) f32
             last  W:  (H_last, 1) bf16 if out_dim==1 else (out_dim, H_last) bf16
             last  b:  (out_dim, 1) f32
    out_ref: (out_dim, bt) f32    -- lane-dense
    """
    out_ref = refs[-1]
    prefs = refs[:-1]

    h_bf = x_ref[...]                          # bf16 operand for the MXU
    h_f32 = h_bf.astype(jnp.float32)

    for li in range(n_hidden):
        w = prefs[2 * li][...]                 # (H_out, H_in) bf16
        b = prefs[2 * li + 1][...]             # (H_out, 1)    f32
        z = jnp.dot(w, h_bf, preferred_element_type=jnp.float32) + b
        h_f32 = jnp.maximum(z, 0.0)            # f32 ReLU on the VPU
        h_bf = h_f32.astype(jnp.bfloat16)      # bf16 for the next MXU matmul

    w_out = prefs[2 * n_hidden][...]
    b_out = prefs[2 * n_hidden + 1][...]       # (out_dim, 1) f32

    if out_dim == 1:
        # VPU/XLU path: broadcast the single weight column across lanes,
        # multiply, reduce over the feature (sublane) axis.  Avoids a
        # degenerate N=1 MXU matmul and yields a lane-dense (1, bt) row.
        w_col = w_out.astype(jnp.float32)                        # (H_last, 1)
        out = jnp.sum(h_f32 * w_col, axis=0, keepdims=True) + b_out
    else:
        # Natural orientation: (out_dim, H_last) @ (H_last, bt) -> (out_dim, bt)
        out = jnp.dot(w_out, h_bf, preferred_element_type=jnp.float32) + b_out

    out_ref[...] = out.astype(out_ref.dtype)


def standard_mlp_forward(x, params, *, batch_tile=None):
    """Fused StandardMLP forward.

    x:      (B, D_in) float32
    params: list of (W, b) in PyTorch nn.Linear layout:
            W: (out_features, in_features), b: (out_features,)
    Returns (B, output_dim) float32.
    """
    B, d_in = x.shape
    n_layers = len(params)
    n_hidden = n_layers - 1
    out_dim = params[-1][0].shape[0]

    if batch_tile is None:
        batch_tile = min(1024, _round_up(B, 128))
    batch_tile = max(128, _round_up(batch_tile, 128))
    b_pad = _round_up(B, batch_tile)
    grid = (b_pad // batch_tile,)

    # Transposed, batch-padded, bf16 input: (d_in, b_pad).  Pure layout
    # plumbing done by XLA outside the kernel.
    x_t = jnp.pad(x.astype(jnp.bfloat16), ((0, b_pad - B), (0, 0))).T

    flat_params = []
    in_specs = [pl.BlockSpec((d_in, batch_tile), lambda i: (0, i))]
    vmem_bytes = 2 * _round_up(d_in, 16) * batch_tile * 2   # double-buffered x tile
    param_bytes = 0

    for li, (w, b) in enumerate(params):
        if li == n_hidden and out_dim == 1:
            w_k = w.astype(jnp.bfloat16).T              # (H_last, 1)
        else:
            w_k = w.astype(jnp.bfloat16)                # (H_out, H_in)
        b_k = b.astype(jnp.float32).reshape(-1, 1)      # (H_out, 1)
        flat_params += [w_k, b_k]
        # Constant index_map -> block index never changes, so Pallas fetches
        # the weights/biases once instead of re-DMA'ing them every grid step.
        in_specs.append(pl.BlockSpec(w_k.shape, lambda i: (0, 0)))
        in_specs.append(pl.BlockSpec(b_k.shape, lambda i: (0, 0)))
        vmem_bytes += (_round_up(w_k.shape[0], 16) * _round_up(w_k.shape[1], 128) * 2
                       + _round_up(b_k.shape[0], 8) * 128 * 4)
        param_bytes += w_k.size * 2 + b_k.size * 4

    widths = [d_in] + [w.shape[0] for (w, _) in params]
    vmem_bytes += 3 * max(widths) * batch_tile * (4 + 2)     # live f32 + bf16 activations
    vmem_bytes += 2 * _round_up(out_dim, 8) * batch_tile * 4  # double-buffered out tile
    vmem_limit = int(min(48 * 2**20, max(16 * 2**20, 2 * vmem_bytes)))

    flops = 2 * b_pad * sum(w.shape[0] * w.shape[1] for (w, _) in params)
    bytes_accessed = x_t.size * 2 + param_bytes + out_dim * b_pad * 4

    out_spec = pl.BlockSpec((out_dim, batch_tile), lambda i: (0, i))
    kernel = functools.partial(_mlp_kernel, n_hidden, out_dim)

    out_t = pl.pallas_call(
        kernel,
        out_shape=jax.ShapeDtypeStruct((out_dim, b_pad), jnp.float32),
        grid=grid,
        in_specs=in_specs,
        out_specs=out_spec,
        compiler_params=pltpu.CompilerParams(
            dimension_semantics=("parallel",),
            vmem_limit_bytes=vmem_limit,
        ),
        cost_estimate=pl.CostEstimate(
            flops=int(flops), transcendentals=0, bytes_accessed=int(bytes_accessed)),
    )(x_t, *flat_params)

    return out_t[:, :B].T                                    # (B, out_dim)


def init_mlp_params(key, input_dim, layer_sizes, output_dim):
    """Deterministic init mimicking nn.Linear defaults (uniform +/- 1/sqrt(fan_in)).

    Returns params in PyTorch layout: W (out_features, in_features), b (out_features,).
    """
    dims = [input_dim] + list(layer_sizes) + [output_dim]
    params = []
    for i in range(len(dims) - 1):
        fan_in, fan_out = dims[i], dims[i + 1]
        key, kw, kb = jax.random.split(key, 3)
        bound = 1.0 / jnp.sqrt(jnp.asarray(fan_in, jnp.float32))
        w = jax.random.uniform(kw, (fan_out, fan_in), jnp.float32, -bound, bound)
        b = jax.random.uniform(kb, (fan_out,), jnp.float32, -bound, bound)
        params.append((w, b))
    return params


def mlp_reference(x, params):
    """Plain-JAX reference (f32 math, weights rounded to bf16 like the kernel)."""
    h = x
    for li, (w, b) in enumerate(params):
        wf = w.astype(jnp.bfloat16).astype(jnp.float32)
        h = h @ wf.T + b
        if li < len(params) - 1:
            h = jnp.maximum(h, 0.0)
    return h


def _run_case(key, batch, input_dim, layer_sizes, output_dim):
    key_x, key_p = jax.random.split(key)
    x = jax.random.normal(key_x, (batch, input_dim), jnp.float32)
    params = init_mlp_params(key_p, input_dim, layer_sizes, output_dim)
    out = jax.block_until_ready(standard_mlp_forward(x, params))
    ref = mlp_reference(x, params)
    assert out.shape == (batch, output_dim), out.shape
    max_err = float(jnp.max(jnp.abs(out - ref)))
    assert jnp.allclose(out, ref, atol=5e-2, rtol=5e-2), max_err


if __name__ == "__main__":
    key = jax.random.PRNGKey(0)
    k1, k2, k3 = jax.random.split(key, 3)

    # Default StandardMLP family: hidden stack + scalar head (VPU/XLU head path).
    _run_case(k1, 8, 32, [128, 128, 128, 128], 1)
    # out_dim > 1 (MXU output path) with a batch that is not a multiple of 128.
    _run_case(k2, 200, 32, [128, 128], 4)
    # len(layer_sizes) == 0 -> single nn.Linear, no activation.
    _run_case(k3, 8, 32, [], 3)

    print("KERNEL_OK")
</pallas_src>

<mosaic_0001>
module attributes {stable_mosaic.version = 11 : i64} {
  func.func @_mlp_kernel(%arg0: i32, %arg1: memref<32x128xbf16, #tpu.memory_space<vmem>>, %arg2: memref<128x32xbf16, #tpu.memory_space<vmem>>, %arg3: memref<128x1xf32, #tpu.memory_space<vmem>>, %arg4: memref<128x128xbf16, #tpu.memory_space<vmem>>, %arg5: memref<128x1xf32, #tpu.memory_space<vmem>>, %arg6: memref<128x128xbf16, #tpu.memory_space<vmem>>, %arg7: memref<128x1xf32, #tpu.memory_space<vmem>>, %arg8: memref<128x128xbf16, #tpu.memory_space<vmem>>, %arg9: memref<128x1xf32, #tpu.memory_space<vmem>>, %arg10: memref<128x1xbf16, #tpu.memory_space<vmem>>, %arg11: memref<1x1xf32, #tpu.memory_space<vmem>>, %arg12: memref<1x128xf32, #tpu.memory_space<vmem>>) attributes {dimension_semantics = [#tpu.dimension_semantics<parallel>], iteration_bounds = array<i64: 1>, scalar_prefetch = 0 : i64, scratch_operands = 0 : i64, tpu.core_type = #tpu.core_type<tc>, window_params = [{transform_indices = @transform_0, window_bounds = array<i64: 32, 128>}, {pipeline_mode = #tpu.pipeline_mode<synchronous>, transform_indices = @transform_1, window_bounds = array<i64: 128, 32>}, {pipeline_mode = #tpu.pipeline_mode<synchronous>, transform_indices = @transform_2, window_bounds = array<i64: 128, 1>}, {pipeline_mode = #tpu.pipeline_mode<synchronous>, transform_indices = @transform_3, window_bounds = array<i64: 128, 128>}, {pipeline_mode = #tpu.pipeline_mode<synchronous>, transform_indices = @transform_4, window_bounds = array<i64: 128, 1>}, {pipeline_mode = #tpu.pipeline_mode<synchronous>, transform_indices = @transform_5, window_bounds = array<i64: 128, 128>}, {pipeline_mode = #tpu.pipeline_mode<synchronous>, transform_indices = @transform_6, window_bounds = array<i64: 128, 1>}, {pipeline_mode = #tpu.pipeline_mode<synchronous>, transform_indices = @transform_7, window_bounds = array<i64: 128, 128>}, {pipeline_mode = #tpu.pipeline_mode<synchronous>, transform_indices = @transform_8, window_bounds = array<i64: 128, 1>}, {pipeline_mode = #tpu.pipeline_mode<synchronous>, transform_indices = @transform_9, window_bounds = array<i64: 128, 1>}, {pipeline_mode = #tpu.pipeline_mode<synchronous>, transform_indices = @transform_10, window_bounds = array<i64: 1, 1>}, {transform_indices = @transform_11, window_bounds = array<i64: 1, 128>}]} {
    %c0 = arith.constant 0 : index
    %c0_0 = arith.constant 0 : index
    %0 = vector.load %arg1[%c0, %c0_0] : memref<32x128xbf16, #tpu.memory_space<vmem>>, vector<32x128xbf16>
    %c0_1 = arith.constant 0 : index
    %c0_2 = arith.constant 0 : index
    %1 = vector.load %arg2[%c0_1, %c0_2] : memref<128x32xbf16, #tpu.memory_space<vmem>>, vector<128x32xbf16>
    %c0_3 = arith.constant 0 : index
    %c0_4 = arith.constant 0 : index
    %2 = vector.load %arg3[%c0_3, %c0_4] : memref<128x1xf32, #tpu.memory_space<vmem>>, vector<128x1xf32>
    %cst = arith.constant dense<0.000000e+00> : vector<128x128xf32>
    %3 = tpu.matmul %1, %0, %cst {dimension_numbers = #tpu.dot_dimension_numbers<[1], [0], [0], [1], [0, 0, 1, 1], [], []>} : vector<128x32xbf16>, vector<32x128xbf16>, vector<128x128xf32> -> vector<128x128xf32>
    %4 = vector.broadcast %2 : vector<128x1xf32> to vector<128x128xf32>
    %5 = arith.addf %3, %4 : vector<128x128xf32>
    %cst_5 = arith.constant 0.000000e+00 : f32
    %6 = vector.broadcast %cst_5 : f32 to vector<128x128xf32>
    %7 = arith.maximumf %5, %6 : vector<128x128xf32>
    %8 = arith.truncf %7 : vector<128x128xf32> to vector<128x128xbf16>
    %c0_6 = arith.constant 0 : index
    %c0_7 = arith.constant 0 : index
    %9 = vector.load %arg4[%c0_6, %c0_7] : memref<128x128xbf16, #tpu.memory_space<vmem>>, vector<128x128xbf16>
    %c0_8 = arith.constant 0 : index
    %c0_9 = arith.constant 0 : index
    %10 = vector.load %arg5[%c0_8, %c0_9] : memref<128x1xf32, #tpu.memory_space<vmem>>, vector<128x1xf32>
    %cst_10 = arith.constant dense<0.000000e+00> : vector<128x128xf32>
    %11 = tpu.matmul %9, %8, %cst_10 {dimension_numbers = #tpu.dot_dimension_numbers<[1], [0], [0], [1], [0, 0, 1, 1], [], []>} : vector<128x128xbf16>, vector<128x128xbf16>, vector<128x128xf32> -> vector<128x128xf32>
    %12 = vector.broadcast %10 : vector<128x1xf32> to vector<128x128xf32>
    %13 = arith.addf %11, %12 : vector<128x128xf32>
    %cst_11 = arith.constant 0.000000e+00 : f32
    %14 = vector.broadcast %cst_11 : f32 to vector<128x128xf32>
    %15 = arith.maximumf %13, %14 : vector<128x128xf32>
    %16 = arith.truncf %15 : vector<128x128xf32> to vector<128x128xbf16>
    %c0_12 = arith.constant 0 : index
    %c0_13 = arith.constant 0 : index
    %17 = vector.load %arg6[%c0_12, %c0_13] : memref<128x128xbf16, #tpu.memory_space<vmem>>, vector<128x128xbf16>
    %c0_14 = arith.constant 0 : index
    %c0_15 = arith.constant 0 : index
    %18 = vector.load %arg7[%c0_14, %c0_15] : memref<128x1xf32, #tpu.memory_space<vmem>>, vector<128x1xf32>
    %cst_16 = arith.constant dense<0.000000e+00> : vector<128x128xf32>
    %19 = tpu.matmul %17, %16, %cst_16 {dimension_numbers = #tpu.dot_dimension_numbers<[1], [0], [0], [1], [0, 0, 1, 1], [], []>} : vector<128x128xbf16>, vector<128x128xbf16>, vector<128x128xf32> -> vector<128x128xf32>
    %20 = vector.broadcast %18 : vector<128x1xf32> to vector<128x128xf32>
    %21 = arith.addf %19, %20 : vector<128x128xf32>
    %cst_17 = arith.constant 0.000000e+00 : f32
    %22 = vector.broadcast %cst_17 : f32 to vector<128x128xf32>
    %23 = arith.maximumf %21, %22 : vector<128x128xf32>
    %24 = arith.truncf %23 : vector<128x128xf32> to vector<128x128xbf16>
    %c0_18 = arith.constant 0 : index
    %c0_19 = arith.constant 0 : index
    %25 = vector.load %arg8[%c0_18, %c0_19] : memref<128x128xbf16, #tpu.memory_space<vmem>>, vector<128x128xbf16>
    %c0_20 = arith.constant 0 : index
    %c0_21 = arith.constant 0 : index
    %26 = vector.load %arg9[%c0_20, %c0_21] : memref<128x1xf32, #tpu.memory_space<vmem>>, vector<128x1xf32>
    %cst_22 = arith.constant dense<0.000000e+00> : vector<128x128xf32>
    %27 = tpu.matmul %25, %24, %cst_22 {dimension_numbers = #tpu.dot_dimension_numbers<[1], [0], [0], [1], [0, 0, 1, 1], [], []>} : vector<128x128xbf16>, vector<128x128xbf16>, vector<128x128xf32> -> vector<128x128xf32>
    %28 = vector.broadcast %26 : vector<128x1xf32> to vector<128x128xf32>
    %29 = arith.addf %27, %28 : vector<128x128xf32>
    %cst_23 = arith.constant 0.000000e+00 : f32
    %30 = vector.broadcast %cst_23 : f32 to vector<128x128xf32>
    %31 = arith.maximumf %29, %30 : vector<128x128xf32>
    %c0_24 = arith.constant 0 : index
    %c0_25 = arith.constant 0 : index
    %32 = vector.load %arg10[%c0_24, %c0_25] : memref<128x1xbf16, #tpu.memory_space<vmem>>, vector<128x1xbf16>
    %c0_26 = arith.constant 0 : index
    %c0_27 = arith.constant 0 : index
    %33 = vector.load %arg11[%c0_26, %c0_27] : memref<1x1xf32, #tpu.memory_space<vmem>>, vector<1x1xf32>
    %34 = arith.extf %32 : vector<128x1xbf16> to vector<128x1xf32>
    %35 = vector.broadcast %34 : vector<128x1xf32> to vector<128x128xf32>
    %36 = arith.mulf %31, %35 : vector<128x128xf32>
    %cst_28 = arith.constant dense<0.000000e+00> : vector<128xf32>
    %37 = vector.multi_reduction <add>, %36, %cst_28 [0] : vector<128x128xf32> to vector<128xf32>
    %38 = vector.shape_cast %37 : vector<128xf32> to vector<1x128xf32>
    %39 = vector.broadcast %33 : vector<1x1xf32> to vector<1x128xf32>
    %40 = arith.addf %38, %39 : vector<1x128xf32>
    %c0_29 = arith.constant 0 : index
    %c0_30 = arith.constant 0 : index
    %41 = vector.load %arg12[%c0_29, %c0_30] : memref<1x128xf32, #tpu.memory_space<vmem>>, vector<1x128xf32>
    tpu.vector_store %arg12[%c0_29, %c0_30], %40 {strides = array<i32>} : memref<1x128xf32, #tpu.memory_space<vmem>>, vector<1x128xf32>,
    return
  }
  func.func @transform_0(%arg0: i32) -> (i32, i32) {
    %c0_i32 = arith.constant 0 : i32
    %c0_i32_0 = arith.constant 0 : i32
    return %c0_i32, %arg0 : i32, i32
  }
  func.func @transform_1(%arg0: i32) -> (i32, i32) {
    %c0_i32 = arith.constant 0 : i32
    %c0_i32_0 = arith.constant 0 : i32
    %c0_i32_1 = arith.constant 0 : i32
    return %c0_i32, %c0_i32_0 : i32, i32
  }
  func.func @transform_2(%arg0: i32) -> (i32, i32) {
    %c0_i32 = arith.constant 0 : i32
    %c0_i32_0 = arith.constant 0 : i32
    %c0_i32_1 = arith.constant 0 : i32
    return %c0_i32, %c0_i32_0 : i32, i32
  }
  func.func @transform_3(%arg0: i32) -> (i32, i32) {
    %c0_i32 = arith.constant 0 : i32
    %c0_i32_0 = arith.constant 0 : i32
    %c0_i32_1 = arith.constant 0 : i32
    return %c0_i32, %c0_i32_0 : i32, i32
  }
  func.func @transform_4(%arg0: i32) -> (i32, i32) {
    %c0_i32 = arith.constant 0 : i32
    %c0_i32_0 = arith.constant 0 : i32
    %c0_i32_1 = arith.constant 0 : i32
    return %c0_i32, %c0_i32_0 : i32, i32
  }
  func.func @transform_5(%arg0: i32) -> (i32, i32) {
    %c0_i32 = arith.constant 0 : i32
    %c0_i32_0 = arith.constant 0 : i32
    %c0_i32_1 = arith.constant 0 : i32
    return %c0_i32, %c0_i32_0 : i32, i32
  }
  func.func @transform_6(%arg0: i32) -> (i32, i32) {
    %c0_i32 = arith.constant 0 : i32
    %c0_i32_0 = arith.constant 0 : i32
    %c0_i32_1 = arith.constant 0 : i32
    return %c0_i32, %c0_i32_0 : i32, i32
  }
  func.func @transform_7(%arg0: i32) -> (i32, i32) {
    %c0_i32 = arith.constant 0 : i32
    %c0_i32_0 = arith.constant 0 : i32
    %c0_i32_1 = arith.constant 0 : i32
    return %c0_i32, %c0_i32_0 : i32, i32
  }
  func.func @transform_8(%arg0: i32) -> (i32, i32) {
    %c0_i32 = arith.constant 0 : i32
    %c0_i32_0 = arith.constant 0 : i32
    %c0_i32_1 = arith.constant 0 : i32
    return %c0_i32, %c0_i32_0 : i32, i32
  }
  func.func @transform_9(%arg0: i32) -> (i32, i32) {
    %c0_i32 = arith.constant 0 : i32
    %c0_i32_0 = arith.constant 0 : i32
    %c0_i32_1 = arith.constant 0 : i32
    return %c0_i32, %c0_i32_0 : i32, i32
  }
  func.func @transform_10(%arg0: i32) -> (i32, i32) {
    %c0_i32 = arith.constant 0 : i32
    %c0_i32_0 = arith.constant 0 : i32
    %c0_i32_1 = arith.constant 0 : i32
    return %c0_i32, %c0_i32_0 : i32, i32
  }
  func.func @transform_11(%arg0: i32) -> (i32, i32) {
    %c0_i32 = arith.constant 0 : i32
    %c0_i32_0 = arith.constant 0 : i32
    return %c0_i32, %arg0 : i32, i32
  }
}

</mosaic_0001>

<llo_original>
// kernel: tpu_custom_call.1
$region0: #{tpu_custom_call.1}
  #allocation0 [shape = 'u32[]', space=smem, size = 0x4, offset = 0x4, fixed_abs, tag = 'smem constant byte address 0x4 - core index']
  #allocation1 [shape = 'u32[144,128]{1,0:T(1,128)}', space=vmem, size = 0x12000, scoped, tag = 'internal scratch']
  #allocation2 [shape = 'f32[1,1]{1,0:T(1,128)S(1)}', space=vmem, size = 0x200, scoped, tag = 'scoped memory for tpu_custom_call.1']
  %s0 = inlined_call_operand.vmem [shape: bf16[32,128], index: 0, kind: input, shape index: {}]
  %s1 = inlined_call_operand.vmem [shape: bf16[128,32], index: 1, kind: input, shape index: {}]
  %s2 = inlined_call_operand.vmem [shape: f32[128,1], index: 2, kind: input, shape index: {}]
  %s3 = inlined_call_operand.vmem [shape: bf16[128,128], index: 3, kind: input, shape index: {}]
  %s4 = inlined_call_operand.vmem [shape: f32[128,1], index: 4, kind: input, shape index: {}]
  %s5 = inlined_call_operand.vmem [shape: bf16[128,128], index: 5, kind: input, shape index: {}]
  %s6 = inlined_call_operand.vmem [shape: f32[128,1], index: 6, kind: input, shape index: {}]
  %s7 = inlined_call_operand.vmem [shape: bf16[128,128], index: 7, kind: input, shape index: {}]
  %s8 = inlined_call_operand.vmem [shape: f32[128,1], index: 8, kind: input, shape index: {}]
  %s9 = inlined_call_operand.vmem [shape: bf16[128,1], index: 9, kind: input, shape index: {}]
  %s10 = inlined_call_operand.<no memory space> [shape: f32[1,1], index: 10, kind: input, shape index: {}]
  %s11 = inlined_call_operand.hbm [shape: f32[1,128], index: 11, kind: output, shape index: {}]
  %s12 = sld [smem:[#allocation0]]
  $region54: #{tpu_custom_call.1} parent=0
    _
  %s14 = ssub.s32 1, %s12
  %s15 = scalar_select 0, %s14, %s12
  %v16 = vstv %s10
  %17 = vst [vmem:[#allocation2] sm:$0x1] %v16
  $region1: #{tpu_custom_call.1} parent=0
    #allocation3 [shape = 'u8[512]{0}', space=vmem, size = 0x400, scoped, tag = 'output window, operand 0, single buffered']
    #allocation4 [shape = 's32[1]{0}', space=sflag, size = 0x4, scoped, tag = 'scoped memory for tpu_custom_call.1']
    %18 = vsyncpa [#allocation4], 0
    // Predicated region
    $region2: #{tpu_custom_call.1} parent=1 // pred_check
      _
    $region3: #{tpu_custom_call.1} parent=1 // pred_check_branch
      %20 = sbr.rel (0) target = $region5
    $region4: #{tpu_custom_call.1} parent=1 // pred_region
      _
    $region5: #{tpu_custom_call.1} parent=1 // pred_fallthru
      _
    // Predicated region
    $region6: #{tpu_custom_call.1} parent=1 // pred_check
      _
    $region7: #{tpu_custom_call.1} parent=1 // pred_check_branch
      %22 = sbr.rel (0) target = $region9
    $region8: #{tpu_custom_call.1} parent=1 // pred_region
      _
    $region9: #{tpu_custom_call.1} parent=1 // pred_fallthru
      _
    // Predicated region
    $region10: #{tpu_custom_call.1} parent=1 // pred_check
      _
    $region11: #{tpu_custom_call.1} parent=1 // pred_check_branch
      %24 = sbr.rel (0) target = $region13
    $region12: #{tpu_custom_call.1} parent=1 // pred_region
      _
    $region13: #{tpu_custom_call.1} parent=1 // pred_fallthru
      _
    // Predicated region
    $region14: #{tpu_custom_call.1} parent=1 // pred_check
      _
    $region15: #{tpu_custom_call.1} parent=1 // pred_check_branch
      %26 = sbr.rel (0) target = $region17
    $region16: #{tpu_custom_call.1} parent=1 // pred_region
      _
    $region17: #{tpu_custom_call.1} parent=1 // pred_fallthru
      _
    // Predicated region
    $region18: #{tpu_custom_call.1} parent=1 // pred_check
      _
    $region19: #{tpu_custom_call.1} parent=1 // pred_check_branch
      %28 = sbr.rel (0) target = $region21
    $region20: #{tpu_custom_call.1} parent=1 // pred_region
      _
    $region21: #{tpu_custom_call.1} parent=1 // pred_fallthru
      _
    // Predicated region
    $region22: #{tpu_custom_call.1} parent=1 // pred_check
      _
    $region23: #{tpu_custom_call.1} parent=1 // pred_check_branch
      %30 = sbr.rel (0) target = $region25
    $region24: #{tpu_custom_call.1} parent=1 // pred_region
      _
    $region25: #{tpu_custom_call.1} parent=1 // pred_fallthru
      _
    // Predicated region
    $region26: #{tpu_custom_call.1} parent=1 // pred_check
      _
    $region27: #{tpu_custom_call.1} parent=1 // pred_check_branch
      %32 = sbr.rel (0) target = $region29
    $region28: #{tpu_custom_call.1} parent=1 // pred_region
      _
    $region29: #{tpu_custom_call.1} parent=1 // pred_fallthru
      _
    // Predicated region
    $region30: #{tpu_custom_call.1} parent=1 // pred_check
      _
    $region31: #{tpu_custom_call.1} parent=1 // pred_check_branch
      %34 = sbr.rel (0) target = $region33
    $region32: #{tpu_custom_call.1} parent=1 // pred_region
      _
    $region33: #{tpu_custom_call.1} parent=1 // pred_fallthru
      _
    // Predicated region
    $region34: #{tpu_custom_call.1} parent=1 // pred_check
      _
    $region35: #{tpu_custom_call.1} parent=1 // pred_check_branch
      %36 = sbr.rel (0) target = $region37
    $region36: #{tpu_custom_call.1} parent=1 // pred_region
      _
    $region37: #{tpu_custom_call.1} parent=1 // pred_fallthru
      _
    // Predicated region
    $region38: #{tpu_custom_call.1} parent=1 // pred_check
      _
    $region39: #{tpu_custom_call.1} parent=1 // pred_check_branch
      %38 = sbr.rel (0) target = $region41
    $region40: #{tpu_custom_call.1} parent=1 // pred_region
      _
    $region41: #{tpu_custom_call.1} parent=1 // pred_fallthru
      _
    // Predicated region
    $region42: #{tpu_custom_call.1} parent=1 // pred_check
      _
    $region43: #{tpu_custom_call.1} parent=1 // pred_check_branch
      %40 = sbr.rel (0) target = $region45
    $region44: #{tpu_custom_call.1} parent=1 // pred_region
      _
    $region45: #{tpu_custom_call.1} parent=1 // pred_fallthru
      _
    %v42 = vld [vmem:[%s0] sm:$0xf]
    %v43 = vld [vmem:[%s0 + $0x4] sm:$0xf]
    %v44 = vld [vmem:[%s0 + $0x8] sm:$0xf]
    %v45 = vld [vmem:[%s0 + $0xc] sm:$0xf]
    %v46 = vld [vmem:[%s1] sm:$0xf]
    %v47 = vld [vmem:[%s1 + $0x4] sm:$0xf]
    %v48 = vld [vmem:[%s1 + $0x8] sm:$0xf]
    %v49 = vld [vmem:[%s1 + $0xc] sm:$0xf]
    %v50 = vld [vmem:[%s1 + $0x10] sm:$0xf]
    %v51 = vld [vmem:[%s1 + $0x14] sm:$0xf]
    %v52 = vld [vmem:[%s1 + $0x18] sm:$0xf]
    %v53 = vld [vmem:[%s1 + $0x1c] sm:$0xf]
    %v54 = vld [vmem:[%s1 + $0x20] sm:$0xf]
    %v55 = vld [vmem:[%s1 + $0x24] sm:$0xf]
    %v56 = vld [vmem:[%s1 + $0x28] sm:$0xf]
    %v57 = vld [vmem:[%s1 + $0x2c] sm:$0xf]
    %v58 = vld [vmem:[%s1 + $0x30] sm:$0xf]
    %v59 = vld [vmem:[%s1 + $0x34] sm:$0xf]
    %v60 = vld [vmem:[%s1 + $0x38] sm:$0xf]
    %v61 = vld [vmem:[%s1 + $0x3c] sm:$0xf]
    %v62 = vld [vmem:[%s2] sm:$0xff]
    %v63 = vld [vmem:[%s2 + $0x8] sm:$0xff]
    %v64 = vld [vmem:[%s2 + $0x10] sm:$0xff]
    %v65 = vld [vmem:[%s2 + $0x18] sm:$0xff]
    %v66 = vld [vmem:[%s2 + $0x20] sm:$0xff]
    %v67 = vld [vmem:[%s2 + $0x28] sm:$0xff]
    %v68 = vld [vmem:[%s2 + $0x30] sm:$0xff]
    %v69 = vld [vmem:[%s2 + $0x38] sm:$0xff]
    %v70 = vld [vmem:[%s2 + $0x40] sm:$0xff]
    %v71 = vld [vmem:[%s2 + $0x48] sm:$0xff]
    %v72 = vld [vmem:[%s2 + $0x50] sm:$0xff]
    %v73 = vld [vmem:[%s2 + $0x58] sm:$0xff]
    %v74 = vld [vmem:[%s2 + $0x60] sm:$0xff]
    %v75 = vld [vmem:[%s2 + $0x68] sm:$0xff]
    %v76 = vld [vmem:[%s2 + $0x70] sm:$0xff]
    %v77 = vld [vmem:[%s2 + $0x78] sm:$0xff]
    %79 = vset.pattern.permute.xlu0 0
    %80 = vperm.xlu0 %79, %v62
    %v81 = vpop.permute.xlu0 %80
    %84 = vset.pattern.permute.xlu0 0
    %85 = vperm.xlu0 %84, %v63
    %v86 = vpop.permute.xlu0 %85
    %89 = vset.pattern.permute.xlu0 0
    %90 = vperm.xlu0 %89, %v64
    %v91 = vpop.permute.xlu0 %90
    %94 = vset.pattern.permute.xlu0 0
    %95 = vperm.xlu0 %94, %v65
    %v96 = vpop.permute.xlu0 %95
    %99 = vset.pattern.permute.xlu0 0
    %100 = vperm.xlu0 %99, %v66
    %v101 = vpop.permute.xlu0 %100
    %104 = vset.pattern.permute.xlu0 0
    %105 = vperm.xlu0 %104, %v67
    %v106 = vpop.permute.xlu0 %105
    %109 = vset.pattern.permute.xlu0 0
    %110 = vperm.xlu0 %109, %v68
    %v111 = vpop.permute.xlu0 %110
    %114 = vset.pattern.permute.xlu0 0
    %115 = vperm.xlu0 %114, %v69
    %v116 = vpop.permute.xlu0 %115
    %119 = vset.pattern.permute.xlu0 0
    %120 = vperm.xlu0 %119, %v70
    %v121 = vpop.permute.xlu0 %120
    %124 = vset.pattern.permute.xlu0 0
    %125 = vperm.xlu0 %124, %v71
    %v126 = vpop.permute.xlu0 %125
    %129 = vset.pattern.permute.xlu0 0
    %130 = vperm.xlu0 %129, %v72
    %v131 = vpop.permute.xlu0 %130
    %134 = vset.pattern.permute.xlu0 0
    %135 = vperm.xlu0 %134, %v73
    %v136 = vpop.permute.xlu0 %135
    %139 = vset.pattern.permute.xlu0 0
    %140 = vperm.xlu0 %139, %v74
    %v141 = vpop.permute.xlu0 %140
    %144 = vset.pattern.permute.xlu0 0
    %145 = vperm.xlu0 %144, %v75
    %v146 = vpop.permute.xlu0 %145
    %149 = vset.pattern.permute.xlu0 0
    %150 = vperm.xlu0 %149, %v76
    %v151 = vpop.permute.xlu0 %150
    %154 = vset.pattern.permute.xlu0 0
    %155 = vperm.xlu0 %154, %v77
    %v156 = vpop.permute.xlu0 %155
    %v174 = vunpack.c.l.b16 %v46
    %v175 = vunpack.c.l.b16 %v47
    %v176 = vunpack.c.l.b16 %v48
    %v177 = vunpack.c.l.b16 %v49
    %v178 = vunpack.c.l.b16 %v50
    %v179 = vunpack.c.l.b16 %v51
    %v180 = vunpack.c.l.b16 %v52
    %v181 = vunpack.c.l.b16 %v53
    %v182 = vunpack.c.l.b16 %v54
    %v183 = vunpack.c.l.b16 %v55
    %v184 = vunpack.c.l.b16 %v56
    %v185 = vunpack.c.l.b16 %v57
    %v186 = vunpack.c.l.b16 %v58
    %v187 = vunpack.c.l.b16 %v59
    %v188 = vunpack.c.l.b16 %v60
    %v189 = vunpack.c.l.b16 %v61
    %v190 = vpack.c.b16 %v175, %v174
    %v191 = vpack.c.b16 %v177, %v176
    %v192 = vpack.c.b16 %v179, %v178
    %v193 = vpack.c.b16 %v181, %v180
    %v194 = vpack.c.b16 %v183, %v182
    %v195 = vpack.c.b16 %v185, %v184
    %v196 = vpack.c.b16 %v187, %v186
    %v197 = vpack.c.b16 %v189, %v188
    %v202 = vunpack.c.l.b16 %v42
    %v203 = vunpack.c.l.b16 %v43
    %v204 = vunpack.c.l.b16 %v44
    %v205 = vunpack.c.l.b16 %v45
    %v206 = vpack.c.b16 %v203, %v202
    %v207 = vpack.c.b16 %v205, %v204
    %vm210 = vcmask 261120
    %v212 = vsel %vm210, %v190, 0
    %v215 = vsel %vm210, %v191, 0
    %v218 = vsel %vm210, %v192, 0
    %v221 = vsel %vm210, %v193, 0
    %v224 = vsel %vm210, %v194, 0
    %v227 = vsel %vm210, %v195, 0
    %v230 = vsel %vm210, %v196, 0
    %v233 = vsel %vm210, %v197, 0
    %235 = vmatprep.subr.bf16.mxu0 0
    %236 = vmatpush1.bf16.msra.mxu0 %v206
    %237 = vmatprep.subr.bf16.mxu0 0
    %238 = vmatpush1.bf16.msra.mxu0 %v207
    %239 = vmatprep.subr.bf16.mxu0 0
    %240 = vmatpush1.bf16.msra.mxu0 0
    %241 = vmatprep.subr.bf16.mxu0 0
    %242 = vmatpush1.bf16.msra.mxu0 0
    %243 = vmatprep.subr.bf16.mxu0 0
    %244 = vmatpush1.bf16.msra.mxu0 0
    %245 = vmatprep.subr.bf16.mxu0 0
    %246 = vmatpush1.bf16.msra.mxu0 0
    %247 = vmatprep.subr.bf16.mxu0 0
    %248 = vmatpush1.bf16.msra.mxu0 0
    %249 = vmatprep.subr.bf16.mxu0 0
    %250 = vmatpush1.bf16.msra.mxu0 0
    %251 = vmatprep.subr.bf16.mxu0 0
    %252 = vmatpush1.bf16.msra.mxu0 0
    %253 = vmatprep.subr.bf16.mxu0 0
    %254 = vmatpush1.bf16.msra.mxu0 0
    %255 = vmatprep.subr.bf16.mxu0 0
    %256 = vmatpush1.bf16.msra.mxu0 0
    %257 = vmatprep.subr.bf16.mxu0 0
    %258 = vmatpush1.bf16.msra.mxu0 0
    %259 = vmatprep.subr.bf16.mxu0 0
    %260 = vmatpush1.bf16.msra.mxu0 0
    %261 = vmatprep.subr.bf16.mxu0 0
    %262 = vmatpush1.bf16.msra.mxu0 0
    %263 = vmatprep.subr.bf16.mxu0 0
    %264 = vmatpush1.bf16.msra.mxu0 0
    %265 = vmatprep.subr.bf16.mxu0 0
    %266 = vmatpush1.bf16.msra.mxu0 0
    %267 = vmatprep.mubr.bf16.mxu0 0
    %268 = vmatmul.mubr.bf16.gmra.mrb[0].mxu0 %v212
    %v269 = vpop.f32.mrb[0].mxu0
    %v270 = vadd.f32 %v81, %v269
    %v271 = vpop.f32.mrb[0].mxu0
    %v272 = vpop.f32.mrb[0].mxu0
    %v273 = vadd.f32 %v86, %v272
    %v274 = vpop.f32.mrb[0].mxu0
    %275 = vmatprep.mubr.bf16.mxu0 0
    %276 = vmatmul.mubr.bf16.gmra.mrb[0].mxu0 %v215
    %v277 = vpop.f32.mrb[0].mxu0
    %v278 = vadd.f32 %v91, %v277
    %v279 = vpop.f32.mrb[0].mxu0
    %v280 = vpop.f32.mrb[0].mxu0
    %v281 = vadd.f32 %v96, %v280
    %v282 = vpop.f32.mrb[0].mxu0
    %283 = vmatprep.mubr.bf16.mxu0 0
    %284 = vmatmul.mubr.bf16.gmra.mrb[0].mxu0 %v218
    %v285 = vpop.f32.mrb[0].mxu0
    %v286 = vadd.f32 %v101, %v285
    %v287 = vpop.f32.mrb[0].mxu0
    %v288 = vpop.f32.mrb[0].mxu0
    %v289 = vadd.f32 %v106, %v288
    %v290 = vpop.f32.mrb[0].mxu0
    %291 = vmatprep.mubr.bf16.mxu0 0
    %292 = vmatmul.mubr.bf16.gmra.mrb[0].mxu0 %v221
    %v293 = vpop.f32.mrb[0].mxu0
    %v294 = vadd.f32 %v111, %v293
    %v295 = vpop.f32.mrb[0].mxu0
    %v296 = vpop.f32.mrb[0].mxu0
    %v297 = vadd.f32 %v116, %v296
    %v298 = vpop.f32.mrb[0].mxu0
    %299 = vmatprep.mubr.bf16.mxu0 0
    %300 = vmatmul.mubr.bf16.gmra.mrb[0].mxu0 %v224
    %v301 = vpop.f32.mrb[0].mxu0
    %v302 = vadd.f32 %v121, %v301
    %v303 = vpop.f32.mrb[0].mxu0
    %v304 = vpop.f32.mrb[0].mxu0
    %v305 = vadd.f32 %v126, %v304
    %v306 = vpop.f32.mrb[0].mxu0
    %307 = vmatprep.mubr.bf16.mxu0 0
    %308 = vmatmul.mubr.bf16.gmra.mrb[0].mxu0 %v227
    %v309 = vpop.f32.mrb[0].mxu0
    %v310 = vadd.f32 %v131, %v309
    %v311 = vpop.f32.mrb[0].mxu0
    %v312 = vpop.f32.mrb[0].mxu0
    %v313 = vadd.f32 %v136, %v312
    %v314 = vpop.f32.mrb[0].mxu0
    %315 = vmatprep.mubr.bf16.mxu0 0
    %316 = vmatmul.mubr.bf16.gmra.mrb[0].mxu0 %v230
    %v317 = vpop.f32.mrb[0].mxu0
    %v318 = vadd.f32 %v141, %v317
    %v319 = vpop.f32.mrb[0].mxu0
    %v320 = vpop.f32.mrb[0].mxu0
    %v321 = vadd.f32 %v146, %v320
    %v322 = vpop.f32.mrb[0].mxu0
    %323 = vmatprep.mubr.bf16.mxu0 0
    %324 = vmatmul.mubr.bf16.gmra.mrb[0].mxu0 %v233
    %v325 = vpop.f32.mrb[0].mxu0
    %v326 = vadd.f32 %v151, %v325
    %v327 = vpop.f32.mrb[0].mxu0
    %v328 = vpop.f32.mrb[0].mxu0
    %v329 = vadd.f32 %v156, %v328
    %v330 = vpop.f32.mrb[0].mxu0
    %331 = vdwg.mxu0
    %v332 = vmax.f32 %v270, 0.0
    %v333 = vmax.f32 %v273, 0.0
    %v334 = vmax.f32 %v278, 0.0
    %v335 = vmax.f32 %v281, 0.0
    %v336 = vmax.f32 %v286, 0.0
    %v337 = vmax.f32 %v289, 0.0
    %v338 = vmax.f32 %v294, 0.0
    %v339 = vmax.f32 %v297, 0.0
    %v340 = vmax.f32 %v302, 0.0
    %v341 = vmax.f32 %v305, 0.0
    %v342 = vmax.f32 %v310, 0.0
    %v343 = vmax.f32 %v313, 0.0
    %v344 = vmax.f32 %v318, 0.0
    %v345 = vmax.f32 %v321, 0.0
    %v346 = vmax.f32 %v326, 0.0
    %v347 = vmax.f32 %v329, 0.0
    %v348 = vpack.c.bf16 %v333, %v332
    %v349 = vpack.c.bf16 %v335, %v334
    %v350 = vpack.c.bf16 %v337, %v336
    %v351 = vpack.c.bf16 %v339, %v338
    %v352 = vpack.c.bf16 %v341, %v340
    %v353 = vpack.c.bf16 %v343, %v342
    %v354 = vpack.c.bf16 %v345, %v344
    %v355 = vpack.c.bf16 %v347, %v346
    %v356 = vld [vmem:[%s3] sm:$0xf]
    %v357 = vld [vmem:[%s3 + $0x4] sm:$0xf]
    %v358 = vld [vmem:[%s3 + $0x8] sm:$0xf]
    %v359 = vld [vmem:[%s3 + $0xc] sm:$0xf]
    %v360 = vld [vmem:[%s3 + $0x10] sm:$0xf]
    %v361 = vld [vmem:[%s3 + $0x14] sm:$0xf]
    %v362 = vld [vmem:[%s3 + $0x18] sm:$0xf]
    %v363 = vld [vmem:[%s3 + $0x1c] sm:$0xf]
    %v364 = vld [vmem:[%s3 + $0x20] sm:$0xf]
    %v365 = vld [vmem:[%s3 + $0x24] sm:$0xf]
    %v366 = vld [vmem:[%s3 + $0x28] sm:$0xf]
    %v367 = vld [vmem:[%s3 + $0x2c] sm:$0xf]
    %v368 = vld [vmem:[%s3 + $0x30] sm:$0xf]
    %v369 = vld [vmem:[%s3 + $0x34] sm:$0xf]
    %v370 = vld [vmem:[%s3 + $0x38] sm:$0xf]
    %v371 = vld [vmem:[%s3 + $0x3c] sm:$0xf]
    %v372 = vld [vmem:[%s4] sm:$0xff]
    %v373 = vld [vmem:[%s4 + $0x8] sm:$0xff]
    %v374 = vld [vmem:[%s4 + $0x10] sm:$0xff]
    %v375 = vld [vmem:[%s4 + $0x18] sm:$0xff]
    %v376 = vld [vmem:[%s4 + $0x20] sm:$0xff]
    %v377 = vld [vmem:[%s4 + $0x28] sm:$0xff]
    %v378 = vld [vmem:[%s4 + $0x30] sm:$0xff]
    %v379 = vld [vmem:[%s4 + $0x38] sm:$0xff]
    %v380 = vld [vmem:[%s4 + $0x40] sm:$0xff]
    %v381 = vld [vmem:[%s4 + $0x48] sm:$0xff]
    %v382 = vld [vmem:[%s4 + $0x50] sm:$0xff]
    %v383 = vld [vmem:[%s4 + $0x58] sm:$0xff]
    %v384 = vld [vmem:[%s4 + $0x60] sm:$0xff]
    %v385 = vld [vmem:[%s4 + $0x68] sm:$0xff]
    %v386 = vld [vmem:[%s4 + $0x70] sm:$0xff]
    %v387 = vld [vmem:[%s4 + $0x78] sm:$0xff]
    %389 = vset.pattern.permute.xlu0 0
    %390 = vperm.xlu0 %389, %v372
    %v391 = vpop.permute.xlu0 %390
    %394 = vset.pattern.permute.xlu0 0
    %395 = vperm.xlu0 %394, %v373
    %v396 = vpop.permute.xlu0 %395
    %399 = vset.pattern.permute.xlu0 0
    %400 = vperm.xlu0 %399, %v374
    %v401 = vpop.permute.xlu0 %400
    %404 = vset.pattern.permute.xlu0 0
    %405 = vperm.xlu0 %404, %v375
    %v406 = vpop.permute.xlu0 %405
    %409 = vset.pattern.permute.xlu0 0
    %410 = vperm.xlu0 %409, %v376
    %v411 = vpop.permute.xlu0 %410
    %414 = vset.pattern.permute.xlu0 0
    %415 = vperm.xlu0 %414, %v377
    %v416 = vpop.permute.xlu0 %415
    %419 = vset.pattern.permute.xlu0 0
    %420 = vperm.xlu0 %419, %v378
    %v421 = vpop.permute.xlu0 %420
    %424 = vset.pattern.permute.xlu0 0
    %425 = vperm.xlu0 %424, %v379
    %v426 = vpop.permute.xlu0 %425
    %429 = vset.pattern.permute.xlu0 0
    %430 = vperm.xlu0 %429, %v380
    %v431 = vpop.permute.xlu0 %430
    %434 = vset.pattern.permute.xlu0 0
    %435 = vperm.xlu0 %434, %v381
    %v436 = vpop.permute.xlu0 %435
    %439 = vset.pattern.permute.xlu0 0
    %440 = vperm.xlu0 %439, %v382
    %v441 = vpop.permute.xlu0 %440
    %444 = vset.pattern.permute.xlu0 0
    %445 = vperm.xlu0 %444, %v383
    %v446 = vpop.permute.xlu0 %445
    %449 = vset.pattern.permute.xlu0 0
    %450 = vperm.xlu0 %449, %v384
    %v451 = vpop.permute.xlu0 %450
    %454 = vset.pattern.permute.xlu0 0
    %455 = vperm.xlu0 %454, %v385
    %v456 = vpop.permute.xlu0 %455
    %459 = vset.pattern.permute.xlu0 0
    %460 = vperm.xlu0 %459, %v386
    %v461 = vpop.permute.xlu0 %460
    %464 = vset.pattern.permute.xlu0 0
    %465 = vperm.xlu0 %464, %v387
    %v466 = vpop.permute.xlu0 %465
    %v484 = vunpack.c.l.b16 %v356
    %v485 = vunpack.c.l.b16 %v357
    %v486 = vunpack.c.l.b16 %v358
    %v487 = vunpack.c.l.b16 %v359
    %v488 = vunpack.c.l.b16 %v360
    %v489 = vunpack.c.l.b16 %v361
    %v490 = vunpack.c.l.b16 %v362
    %v491 = vunpack.c.l.b16 %v363
    %v492 = vunpack.c.l.b16 %v364
    %v493 = vunpack.c.l.b16 %v365
    %v494 = vunpack.c.l.b16 %v366
    %v495 = vunpack.c.l.b16 %v367
    %v496 = vunpack.c.l.b16 %v368
    %v497 = vunpack.c.l.b16 %v369
    %v498 = vunpack.c.l.b16 %v370
    %v499 = vunpack.c.l.b16 %v371
    %v500 = vpack.c.b16 %v485, %v484
    %v501 = vpack.c.b16 %v487, %v486
    %v502 = vpack.c.b16 %v489, %v488
    %v503 = vpack.c.b16 %v491, %v490
    %v504 = vpack.c.b16 %v493, %v492
    %v505 = vpack.c.b16 %v495, %v494
    %v506 = vpack.c.b16 %v497, %v496
    %v507 = vpack.c.b16 %v499, %v498
    %516 = vmatprep.subr.bf16.mxu0 0
    %517 = vmatpush1.bf16.msra.mxu0 %v348
    %518 = vmatprep.subr.bf16.mxu0 0
    %519 = vmatpush1.bf16.msra.mxu0 %v349
    %520 = vmatprep.subr.bf16.mxu0 0
    %521 = vmatpush1.bf16.msra.mxu0 %v350
    %522 = vmatprep.subr.bf16.mxu0 0
    %523 = vmatpush1.bf16.msra.mxu0 %v351
    %524 = vmatprep.subr.bf16.mxu0 0
    %525 = vmatpush1.bf16.msra.mxu0 %v352
    %526 = vmatprep.subr.bf16.mxu0 0
    %527 = vmatpush1.bf16.msra.mxu0 %v353
    %528 = vmatprep.subr.bf16.mxu0 0
    %529 = vmatpush1.bf16.msra.mxu0 %v354
    %530 = vmatprep.subr.bf16.mxu0 0
    %531 = vmatpush1.bf16.msra.mxu0 %v355
    %532 = vmatprep.subr.bf16.mxu0 0
    %533 = vmatpush1.bf16.msra.mxu0 0
    %534 = vmatprep.subr.bf16.mxu0 0
    %535 = vmatpush1.bf16.msra.mxu0 0
    %536 = vmatprep.subr.bf16.mxu0 0
    %537 = vmatpush1.bf16.msra.mxu0 0
    %538 = vmatprep.subr.bf16.mxu0 0
    %539 = vmatpush1.bf16.msra.mxu0 0
    %540 = vmatprep.subr.bf16.mxu0 0
    %541 = vmatpush1.bf16.msra.mxu0 0
    %542 = vmatprep.subr.bf16.mxu0 0
    %543 = vmatpush1.bf16.msra.mxu0 0
    %544 = vmatprep.subr.bf16.mxu0 0
    %545 = vmatpush1.bf16.msra.mxu0 0
    %546 = vmatprep.subr.bf16.mxu0 0
    %547 = vmatpush1.bf16.msra.mxu0 0
    %548 = vmatprep.mubr.bf16.mxu0 0
    %549 = vmatmul.mubr.bf16.gmra.mrb[0].mxu0 %v500
    %v550 = vpop.f32.mrb[0].mxu0
    %v551 = vadd.f32 %v391, %v550
    %v552 = vpop.f32.mrb[0].mxu0
    %v553 = vpop.f32.mrb[0].mxu0
    %v554 = vadd.f32 %v396, %v553
    %v555 = vpop.f32.mrb[0].mxu0
    %556 = vmatprep.mubr.bf16.mxu0 0
    %557 = vmatmul.mubr.bf16.gmra.mrb[0].mxu0 %v501
    %v558 = vpop.f32.mrb[0].mxu0
    %v559 = vadd.f32 %v401, %v558
    %v560 = vpop.f32.mrb[0].mxu0
    %v561 = vpop.f32.mrb[0].mxu0
    %v562 = vadd.f32 %v406, %v561
    %v563 = vpop.f32.mrb[0].mxu0
    %564 = vmatprep.mubr.bf16.mxu0 0
    %565 = vmatmul.mubr.bf16.gmra.mrb[0].mxu0 %v502
    %v566 = vpop.f32.mrb[0].mxu0
    %v567 = vadd.f32 %v411, %v566
    %v568 = vpop.f32.mrb[0].mxu0
    %v569 = vpop.f32.mrb[0].mxu0
    %v570 = vadd.f32 %v416, %v569
    %v571 = vpop.f32.mrb[0].mxu0
    %572 = vmatprep.mubr.bf16.mxu0 0
    %573 = vmatmul.mubr.bf16.gmra.mrb[0].mxu0 %v503
    %v574 = vpop.f32.mrb[0].mxu0
    %v575 = vadd.f32 %v421, %v574
    %v576 = vpop.f32.mrb[0].mxu0
    %v577 = vpop.f32.mrb[0].mxu0
    %v578 = vadd.f32 %v426, %v577
    %v579 = vpop.f32.mrb[0].mxu0
    %580 = vmatprep.mubr.bf16.mxu0 0
    %581 = vmatmul.mubr.bf16.gmra.mrb[0].mxu0 %v504
    %v582 = vpop.f32.mrb[0].mxu0
    %v583 = vadd.f32 %v431, %v582
    %v584 = vpop.f32.mrb[0].mxu0
    %v585 = vpop.f32.mrb[0].mxu0
    %v586 = vadd.f32 %v436, %v585
    %v587 = vpop.f32.mrb[0].mxu0
    %588 = vmatprep.mubr.bf16.mxu0 0
    %589 = vmatmul.mubr.bf16.gmra.mrb[0].mxu0 %v505
    %v590 = vpop.f32.mrb[0].mxu0
    %v591 = vadd.f32 %v441, %v590
    %v592 = vpop.f32.mrb[0].mxu0
    %v593 = vpop.f32.mrb[0].mxu0
    %v594 = vadd.f32 %v446, %v593
    %v595 = vpop.f32.mrb[0].mxu0
    %596 = vmatprep.mubr.bf16.mxu0 0
    %597 = vmatmul.mubr.bf16.gmra.mrb[0].mxu0 %v506
    %v598 = vpop.f32.mrb[0].mxu0
    %v599 = vadd.f32 %v451, %v598
    %v600 = vpop.f32.mrb[0].mxu0
    %v601 = vpop.f32.mrb[0].mxu0
    %v602 = vadd.f32 %v456, %v601
    %v603 = vpop.f32.mrb[0].mxu0
    %604 = vmatprep.mubr.bf16.mxu0 0
    %605 = vmatmul.mubr.bf16.gmra.mrb[0].mxu0 %v507
    %v606 = vpop.f32.mrb[0].mxu0
    %v607 = vadd.f32 %v461, %v606
    %v608 = vpop.f32.mrb[0].mxu0
    %v609 = vpop.f32.mrb[0].mxu0
    %v610 = vadd.f32 %v466, %v609
    %v611 = vpop.f32.mrb[0].mxu0
    %612 = vdwg.mxu0
    %v613 = vmax.f32 %v551, 0.0
    %v614 = vmax.f32 %v554, 0.0
    %v615 = vmax.f32 %v559, 0.0
    %v616 = vmax.f32 %v562, 0.0
    %v617 = vmax.f32 %v567, 0.0
    %v618 = vmax.f32 %v570, 0.0
    %v619 = vmax.f32 %v575, 0.0
    %v620 = vmax.f32 %v578, 0.0
    %v621 = vmax.f32 %v583, 0.0
    %v622 = vmax.f32 %v586, 0.0
    %v623 = vmax.f32 %v591, 0.0
    %v624 = vmax.f32 %v594, 0.0
    %v625 = vmax.f32 %v599, 0.0
    %v626 = vmax.f32 %v602, 0.0
    %v627 = vmax.f32 %v607, 0.0
    %v628 = vmax.f32 %v610, 0.0
    %v629 = vpack.c.bf16 %v614, %v613
    %v630 = vpack.c.bf16 %v616, %v615
    %v631 = vpack.c.bf16 %v618, %v617
    %v632 = vpack.c.bf16 %v620, %v619
    %v633 = vpack.c.bf16 %v622, %v621
    %v634 = vpack.c.bf16 %v624, %v623
    %v635 = vpack.c.bf16 %v626, %v625
    %v636 = vpack.c.bf16 %v628, %v627
    %v637 = vld [vmem:[%s5] sm:$0xf]
    %v638 = vld [vmem:[%s5 + $0x4] sm:$0xf]
    %v639 = vld [vmem:[%s5 + $0x8] sm:$0xf]
    %v640 = vld [vmem:[%s5 + $0xc] sm:$0xf]
    %v641 = vld [vmem:[%s5 + $0x10] sm:$0xf]
    %v642 = vld [vmem:[%s5 + $0x14] sm:$0xf]
    %v643 = vld [vmem:[%s5 + $0x18] sm:$0xf]
    %v644 = vld [vmem:[%s5 + $0x1c] sm:$0xf]
    %v645 = vld [vmem:[%s5 + $0x20] sm:$0xf]
    %v646 = vld [vmem:[%s5 + $0x24] sm:$0xf]
    %v647 = vld [vmem:[%s5 + $0x28] sm:$0xf]
    %v648 = vld [vmem:[%s5 + $0x2c] sm:$0xf]
    %v649 = vld [vmem:[%s5 + $0x30] sm:$0xf]
    %v650 = vld [vmem:[%s5 + $0x34] sm:$0xf]
    %v651 = vld [vmem:[%s5 + $0x38] sm:$0xf]
    %v652 = vld [vmem:[%s5 + $0x3c] sm:$0xf]
    %v653 = vld [vmem:[%s6] sm:$0xff]
    %v654 = vld [vmem:[%s6 + $0x8] sm:$0xff]
    %v655 = vld [vmem:[%s6 + $0x10] sm:$0xff]
    %v656 = vld [vmem:[%s6 + $0x18] sm:$0xff]
    %v657 = vld [vmem:[%s6 + $0x20] sm:$0xff]
    %v658 = vld [vmem:[%s6 + $0x28] sm:$0xff]
    %v659 = vld [vmem:[%s6 + $0x30] sm:$0xff]
    %v660 = vld [vmem:[%s6 + $0x38] sm:$0xff]
    %v661 = vld [vmem:[%s6 + $0x40] sm:$0xff]
    %v662 = vld [vmem:[%s6 + $0x48] sm:$0xff]
    %v663 = vld [vmem:[%s6 + $0x50] sm:$0xff]
    %v664 = vld [vmem:[%s6 + $0x58] sm:$0xff]
    %v665 = vld [vmem:[%s6 + $0x60] sm:$0xff]
    %v666 = vld [vmem:[%s6 + $0x68] sm:$0xff]
    %v667 = vld [vmem:[%s6 + $0x70] sm:$0xff]
    %v668 = vld [vmem:[%s6 + $0x78] sm:$0xff]
    %670 = vset.pattern.permute.xlu0 0
    %671 = vperm.xlu0 %670, %v653
    %v672 = vpop.permute.xlu0 %671
    %675 = vset.pattern.permute.xlu0 0
    %676 = vperm.xlu0 %675, %v654
    %v677 = vpop.permute.xlu0 %676
    %680 = vset.pattern.permute.xlu0 0
    %681 = vperm.xlu0 %680, %v655
    %v682 = vpop.permute.xlu0 %681
    %685 = vset.pattern.permute.xlu0 0
    %686 = vperm.xlu0 %685, %v656
    %v687 = vpop.permute.xlu0 %686
    %690 = vset.pattern.permute.xlu0 0
    %691 = vperm.xlu0 %690, %v657
    %v692 = vpop.permute.xlu0 %691
    %695 = vset.pattern.permute.xlu0 0
    %696 = vperm.xlu0 %695, %v658
    %v697 = vpop.permute.xlu0 %696
    %700 = vset.pattern.permute.xlu0 0
    %701 = vperm.xlu0 %700, %v659
    %v702 = vpop.permute.xlu0 %701
    %705 = vset.pattern.permute.xlu0 0
    %706 = vperm.xlu0 %705, %v660
    %v707 = vpop.permute.xlu0 %706
    %710 = vset.pattern.permute.xlu0 0
    %711 = vperm.xlu0 %710, %v661
    %v712 = vpop.permute.xlu0 %711
    %715 = vset.pattern.permute.xlu0 0
    %716 = vperm.xlu0 %715, %v662
    %v717 = vpop.permute.xlu0 %716
    %720 = vset.pattern.permute.xlu0 0
    %721 = vperm.xlu0 %720, %v663
    %v722 = vpop.permute.xlu0 %721
    %725 = vset.pattern.permute.xlu0 0
    %726 = vperm.xlu0 %725, %v664
    %v727 = vpop.permute.xlu0 %726
    %730 = vset.pattern.permute.xlu0 0
    %731 = vperm.xlu0 %730, %v665
    %v732 = vpop.permute.xlu0 %731
    %735 = vset.pattern.permute.xlu0 0
    %736 = vperm.xlu0 %735, %v666
    %v737 = vpop.permute.xlu0 %736
    %740 = vset.pattern.permute.xlu0 0
    %741 = vperm.xlu0 %740, %v667
    %v742 = vpop.permute.xlu0 %741
    %745 = vset.pattern.permute.xlu0 0
    %746 = vperm.xlu0 %745, %v668
    %v747 = vpop.permute.xlu0 %746
    %v765 = vunpack.c.l.b16 %v637
    %v766 = vunpack.c.l.b16 %v638
    %v767 = vunpack.c.l.b16 %v639
    %v768 = vunpack.c.l.b16 %v640
    %v769 = vunpack.c.l.b16 %v641
    %v770 = vunpack.c.l.b16 %v642
    %v771 = vunpack.c.l.b16 %v643
    %v772 = vunpack.c.l.b16 %v644
    %v773 = vunpack.c.l.b16 %v645
    %v774 = vunpack.c.l.b16 %v646
    %v775 = vunpack.c.l.b16 %v647
    %v776 = vunpack.c.l.b16 %v648
    %v777 = vunpack.c.l.b16 %v649
    %v778 = vunpack.c.l.b16 %v650
    %v779 = vunpack.c.l.b16 %v651
    %v780 = vunpack.c.l.b16 %v652
    %v781 = vpack.c.b16 %v766, %v765
    %v782 = vpack.c.b16 %v768, %v767
    %v783 = vpack.c.b16 %v770, %v769
    %v784 = vpack.c.b16 %v772, %v771
    %v785 = vpack.c.b16 %v774, %v773
    %v786 = vpack.c.b16 %v776, %v775
    %v787 = vpack.c.b16 %v778, %v777
    %v788 = vpack.c.b16 %v780, %v779
    %797 = vmatprep.subr.bf16.mxu0 0
    %798 = vmatpush1.bf16.msra.mxu0 %v629
    %799 = vmatprep.subr.bf16.mxu0 0
    %800 = vmatpush1.bf16.msra.mxu0 %v630
    %801 = vmatprep.subr.bf16.mxu0 0
    %802 = vmatpush1.bf16.msra.mxu0 %v631
    %803 = vmatprep.subr.bf16.mxu0 0
    %804 = vmatpush1.bf16.msra.mxu0 %v632
    %805 = vmatprep.subr.bf16.mxu0 0
    %806 = vmatpush1.bf16.msra.mxu0 %v633
    %807 = vmatprep.subr.bf16.mxu0 0
    %808 = vmatpush1.bf16.msra.mxu0 %v634
    %809 = vmatprep.subr.bf16.mxu0 0
    %810 = vmatpush1.bf16.msra.mxu0 %v635
    %811 = vmatprep.subr.bf16.mxu0 0
    %812 = vmatpush1.bf16.msra.mxu0 %v636
    %813 = vmatprep.subr.bf16.mxu0 0
    %814 = vmatpush1.bf16.msra.mxu0 0
    %815 = vmatprep.subr.bf16.mxu0 0
    %816 = vmatpush1.bf16.msra.mxu0 0
    %817 = vmatprep.subr.bf16.mxu0 0
    %818 = vmatpush1.bf16.msra.mxu0 0
    %819 = vmatprep.subr.bf16.mxu0 0
    %820 = vmatpush1.bf16.msra.mxu0 0
    %821 = vmatprep.subr.bf16.mxu0 0
    %822 = vmatpush1.bf16.msra.mxu0 0
    %823 = vmatprep.subr.bf16.mxu0 0
    %824 = vmatpush1.bf16.msra.mxu0 0
    %825 = vmatprep.subr.bf16.mxu0 0
    %826 = vmatpush1.bf16.msra.mxu0 0
    %827 = vmatprep.subr.bf16.mxu0 0
    %828 = vmatpush1.bf16.msra.mxu0 0
    %829 = vmatprep.mubr.bf16.mxu0 0
    %830 = vmatmul.mubr.bf16.gmra.mrb[0].mxu0 %v781
    %v831 = vpop.f32.mrb[0].mxu0
    %v832 = vadd.f32 %v672, %v831
    %v833 = vpop.f32.mrb[0].mxu0
    %v834 = vpop.f32.mrb[0].mxu0
    %v835 = vadd.f32 %v677, %v834
    %v836 = vpop.f32.mrb[0].mxu0
    %837 = vmatprep.mubr.bf16.mxu0 0
    %838 = vmatmul.mubr.bf16.gmra.mrb[0].mxu0 %v782
    %v839 = vpop.f32.mrb[0].mxu0
    %v840 = vadd.f32 %v682, %v839
    %v841 = vpop.f32.mrb[0].mxu0
    %v842 = vpop.f32.mrb[0].mxu0
    %v843 = vadd.f32 %v687, %v842
    %v844 = vpop.f32.mrb[0].mxu0
    %845 = vmatprep.mubr.bf16.mxu0 0
    %846 = vmatmul.mubr.bf16.gmra.mrb[0].mxu0 %v783
    %v847 = vpop.f32.mrb[0].mxu0
    %v848 = vadd.f32 %v692, %v847
    %v849 = vpop.f32.mrb[0].mxu0
    %v850 = vpop.f32.mrb[0].mxu0
    %v851 = vadd.f32 %v697, %v850
    %v852 = vpop.f32.mrb[0].mxu0
    %853 = vmatprep.mubr.bf16.mxu0 0
    %854 = vmatmul.mubr.bf16.gmra.mrb[0].mxu0 %v784
    %v855 = vpop.f32.mrb[0].mxu0
    %v856 = vadd.f32 %v702, %v855
    %v857 = vpop.f32.mrb[0].mxu0
    %v858 = vpop.f32.mrb[0].mxu0
    %v859 = vadd.f32 %v707, %v858
    %v860 = vpop.f32.mrb[0].mxu0
    %861 = vmatprep.mubr.bf16.mxu0 0
    %862 = vmatmul.mubr.bf16.gmra.mrb[0].mxu0 %v785
    %v863 = vpop.f32.mrb[0].mxu0
    %v864 = vadd.f32 %v712, %v863
    %v865 = vpop.f32.mrb[0].mxu0
    %v866 = vpop.f32.mrb[0].mxu0
    %v867 = vadd.f32 %v717, %v866
    %v868 = vpop.f32.mrb[0].mxu0
    %869 = vmatprep.mubr.bf16.mxu0 0
    %870 = vmatmul.mubr.bf16.gmra.mrb[0].mxu0 %v786
    %v871 = vpop.f32.mrb[0].mxu0
    %v872 = vadd.f32 %v722, %v871
    %v873 = vpop.f32.mrb[0].mxu0
    %v874 = vpop.f32.mrb[0].mxu0
    %v875 = vadd.f32 %v727, %v874
    %v876 = vpop.f32.mrb[0].mxu0
    %877 = vmatprep.mubr.bf16.mxu0 0
    %878 = vmatmul.mubr.bf16.gmra.mrb[0].mxu0 %v787
    %v879 = vpop.f32.mrb[0].mxu0
    %v880 = vadd.f32 %v732, %v879
    %v881 = vpop.f32.mrb[0].mxu0
    %v882 = vpop.f32.mrb[0].mxu0
    %v883 = vadd.f32 %v737, %v882
    %v884 = vpop.f32.mrb[0].mxu0
    %885 = vmatprep.mubr.bf16.mxu0 0
    %886 = vmatmul.mubr.bf16.gmra.mrb[0].mxu0 %v788
    %v887 = vpop.f32.mrb[0].mxu0
    %v888 = vadd.f32 %v742, %v887
    %v889 = vpop.f32.mrb[0].mxu0
    %v890 = vpop.f32.mrb[0].mxu0
    %v891 = vadd.f32 %v747, %v890
    %v892 = vpop.f32.mrb[0].mxu0
    %893 = vdwg.mxu0
    %v894 = vmax.f32 %v832, 0.0
    %v895 = vmax.f32 %v835, 0.0
    %v896 = vmax.f32 %v840, 0.0
    %v897 = vmax.f32 %v843, 0.0
    %v898 = vmax.f32 %v848, 0.0
    %v899 = vmax.f32 %v851, 0.0
    %v900 = vmax.f32 %v856, 0.0
    %v901 = vmax.f32 %v859, 0.0
    %v902 = vmax.f32 %v864, 0.0
    %v903 = vmax.f32 %v867, 0.0
    %v904 = vmax.f32 %v872, 0.0
    %v905 = vmax.f32 %v875, 0.0
    %v906 = vmax.f32 %v880, 0.0
    %v907 = vmax.f32 %v883, 0.0
    %v908 = vmax.f32 %v888, 0.0
    %v909 = vmax.f32 %v891, 0.0
    %v910 = vpack.c.bf16 %v895, %v894
    %v911 = vpack.c.bf16 %v897, %v896
    %v912 = vpack.c.bf16 %v899, %v898
    %v913 = vpack.c.bf16 %v901, %v900
    %v914 = vpack.c.bf16 %v903, %v902
    %v915 = vpack.c.bf16 %v905, %v904
    %v916 = vpack.c.bf16 %v907, %v906
    %v917 = vpack.c.bf16 %v909, %v908
    %v918 = vld [vmem:[%s7] sm:$0xf]
    %v919 = vld [vmem:[%s7 + $0x4] sm:$0xf]
    %v920 = vld [vmem:[%s7 + $0x8] sm:$0xf]
    %v921 = vld [vmem:[%s7 + $0xc] sm:$0xf]
    %v922 = vld [vmem:[%s7 + $0x10] sm:$0xf]
    %v923 = vld [vmem:[%s7 + $0x14] sm:$0xf]
    %v924 = vld [vmem:[%s7 + $0x18] sm:$0xf]
    %v925 = vld [vmem:[%s7 + $0x1c] sm:$0xf]
    %v926 = vld [vmem:[%s7 + $0x20] sm:$0xf]
    %v927 = vld [vmem:[%s7 + $0x24] sm:$0xf]
    %v928 = vld [vmem:[%s7 + $0x28] sm:$0xf]
    %v929 = vld [vmem:[%s7 + $0x2c] sm:$0xf]
    %v930 = vld [vmem:[%s7 + $0x30] sm:$0xf]
    %v931 = vld [vmem:[%s7 + $0x34] sm:$0xf]
    %v932 = vld [vmem:[%s7 + $0x38] sm:$0xf]
    %v933 = vld [vmem:[%s7 + $0x3c] sm:$0xf]
    %v934 = vld [vmem:[%s8] sm:$0xff]
    %v935 = vld [vmem:[%s8 + $0x8] sm:$0xff]
    %v936 = vld [vmem:[%s8 + $0x10] sm:$0xff]
    %v937 = vld [vmem:[%s8 + $0x18] sm:$0xff]
    %v938 = vld [vmem:[%s8 + $0x20] sm:$0xff]
    %v939 = vld [vmem:[%s8 + $0x28] sm:$0xff]
    %v940 = vld [vmem:[%s8 + $0x30] sm:$0xff]
    %v941 = vld [vmem:[%s8 + $0x38] sm:$0xff]
    %v942 = vld [vmem:[%s8 + $0x40] sm:$0xff]
    %v943 = vld [vmem:[%s8 + $0x48] sm:$0xff]
    %v944 = vld [vmem:[%s8 + $0x50] sm:$0xff]
    %v945 = vld [vmem:[%s8 + $0x58] sm:$0xff]
    %v946 = vld [vmem:[%s8 + $0x60] sm:$0xff]
    %v947 = vld [vmem:[%s8 + $0x68] sm:$0xff]
    %v948 = vld [vmem:[%s8 + $0x70] sm:$0xff]
    %v949 = vld [vmem:[%s8 + $0x78] sm:$0xff]
    %951 = vset.pattern.permute.xlu0 0
    %952 = vperm.xlu0 %951, %v934
    %v953 = vpop.permute.xlu0 %952
    %956 = vset.pattern.permute.xlu0 0
    %957 = vperm.xlu0 %956, %v935
    %v958 = vpop.permute.xlu0 %957
    %961 = vset.pattern.permute.xlu0 0
    %962 = vperm.xlu0 %961, %v936
    %v963 = vpop.permute.xlu0 %962
    %966 = vset.pattern.permute.xlu0 0
    %967 = vperm.xlu0 %966, %v937
    %v968 = vpop.permute.xlu0 %967
    %971 = vset.pattern.permute.xlu0 0
    %972 = vperm.xlu0 %971, %v938
    %v973 = vpop.permute.xlu0 %972
    %976 = vset.pattern.permute.xlu0 0
    %977 = vperm.xlu0 %976, %v939
    %v978 = vpop.permute.xlu0 %977
    %981 = vset.pattern.permute.xlu0 0
    %982 = vperm.xlu0 %981, %v940
    %v983 = vpop.permute.xlu0 %982
    %986 = vset.pattern.permute.xlu0 0
    %987 = vperm.xlu0 %986, %v941
    %v988 = vpop.permute.xlu0 %987
    %991 = vset.pattern.permute.xlu0 0
    %992 = vperm.xlu0 %991, %v942
    %v993 = vpop.permute.xlu0 %992
    %996 = vset.pattern.permute.xlu0 0
    %997 = vperm.xlu0 %996, %v943
    %v998 = vpop.permute.xlu0 %997
    %1001 = vset.pattern.permute.xlu0 0
    %1002 = vperm.xlu0 %1001, %v944
    %v1003 = vpop.permute.xlu0 %1002
    %1006 = vset.pattern.permute.xlu0 0
    %1007 = vperm.xlu0 %1006, %v945
    %v1008 = vpop.permute.xlu0 %1007
    %1011 = vset.pattern.permute.xlu0 0
    %1012 = vperm.xlu0 %1011, %v946
    %v1013 = vpop.permute.xlu0 %1012
    %1016 = vset.pattern.permute.xlu0 0
    %1017 = vperm.xlu0 %1016, %v947
    %v1018 = vpop.permute.xlu0 %1017
    %1021 = vset.pattern.permute.xlu0 0
    %1022 = vperm.xlu0 %1021, %v948
    %v1023 = vpop.permute.xlu0 %1022
    %1026 = vset.pattern.permute.xlu0 0
    %1027 = vperm.xlu0 %1026, %v949
    %v1028 = vpop.permute.xlu0 %1027
    %v1046 = vunpack.c.l.b16 %v918
    %v1047 = vunpack.c.l.b16 %v919
    %v1048 = vunpack.c.l.b16 %v920
    %v1049 = vunpack.c.l.b16 %v921
    %v1050 = vunpack.c.l.b16 %v922
    %v1051 = vunpack.c.l.b16 %v923
    %v1052 = vunpack.c.l.b16 %v924
    %v1053 = vunpack.c.l.b16 %v925
    %v1054 = vunpack.c.l.b16 %v926
    %v1055 = vunpack.c.l.b16 %v927
    %v1056 = vunpack.c.l.b16 %v928
    %v1057 = vunpack.c.l.b16 %v929
    %v1058 = vunpack.c.l.b16 %v930
    %v1059 = vunpack.c.l.b16 %v931
    %v1060 = vunpack.c.l.b16 %v932
    %v1061 = vunpack.c.l.b16 %v933
    %v1062 = vpack.c.b16 %v1047, %v1046
    %v1063 = vpack.c.b16 %v1049, %v1048
    %v1064 = vpack.c.b16 %v1051, %v1050
    %v1065 = vpack.c.b16 %v1053, %v1052
    %v1066 = vpack.c.b16 %v1055, %v1054
    %v1067 = vpack.c.b16 %v1057, %v1056
    %v1068 = vpack.c.b16 %v1059, %v1058
    %v1069 = vpack.c.b16 %v1061, %v1060
    %1078 = vmatprep.subr.bf16.mxu0 0
    %1079 = vmatpush1.bf16.msra.mxu0 %v910
    %1080 = vmatprep.subr.bf16.mxu0 0
    %1081 = vmatpush1.bf16.msra.mxu0 %v911
    %1082 = vmatprep.subr.bf16.mxu0 0
    %1083 = vmatpush1.bf16.msra.mxu0 %v912
    %1084 = vmatprep.subr.bf16.mxu0 0
    %1085 = vmatpush1.bf16.msra.mxu0 %v913
    %1086 = vmatprep.subr.bf16.mxu0 0
    %1087 = vmatpush1.bf16.msra.mxu0 %v914
    %1088 = vmatprep.subr.bf16.mxu0 0
    %1089 = vmatpush1.bf16.msra.mxu0 %v915
    %1090 = vmatprep.subr.bf16.mxu0 0
    %1091 = vmatpush1.bf16.msra.mxu0 %v916
    %1092 = vmatprep.subr.bf16.mxu0 0
    %1093 = vmatpush1.bf16.msra.mxu0 %v917
    %1094 = vmatprep.subr.bf16.mxu0 0
    %1095 = vmatpush1.bf16.msra.mxu0 0
    %1096 = vmatprep.subr.bf16.mxu0 0
    %1097 = vmatpush1.bf16.msra.mxu0 0
    %1098 = vmatprep.subr.bf16.mxu0 0
    %1099 = vmatpush1.bf16.msra.mxu0 0
    %1100 = vmatprep.subr.bf16.mxu0 0
    %1101 = vmatpush1.bf16.msra.mxu0 0
    %1102 = vmatprep.subr.bf16.mxu0 0
    %1103 = vmatpush1.bf16.msra.mxu0 0
    %1104 = vmatprep.subr.bf16.mxu0 0
    %1105 = vmatpush1.bf16.msra.mxu0 0
    %1106 = vmatprep.subr.bf16.mxu0 0
    %1107 = vmatpush1.bf16.msra.mxu0 0
    %1108 = vmatprep.subr.bf16.mxu0 0
    %1109 = vmatpush1.bf16.msra.mxu0 0
    %1110 = vmatprep.mubr.bf16.mxu0 0
    %1111 = vmatmul.mubr.bf16.gmra.mrb[0].mxu0 %v1062
    %v1112 = vpop.f32.mrb[0].mxu0
    %v1113 = vadd.f32 %v953, %v1112
    %v1114 = vpop.f32.mrb[0].mxu0
    %v1115 = vpop.f32.mrb[0].mxu0
    %v1116 = vadd.f32 %v958, %v1115
    %v1117 = vpop.f32.mrb[0].mxu0
    %1118 = vmatprep.mubr.bf16.mxu0 0
    %1119 = vmatmul.mubr.bf16.gmra.mrb[0].mxu0 %v1063
    %v1120 = vpop.f32.mrb[0].mxu0
    %v1121 = vadd.f32 %v963, %v1120
    %v1122 = vpop.f32.mrb[0].mxu0
    %v1123 = vpop.f32.mrb[0].mxu0
    %v1124 = vadd.f32 %v968, %v1123
    %v1125 = vpop.f32.mrb[0].mxu0
    %1126 = vmatprep.mubr.bf16.mxu0 0
    %1127 = vmatmul.mubr.bf16.gmra.mrb[0].mxu0 %v1064
    %v1128 = vpop.f32.mrb[0].mxu0
    %v1129 = vadd.f32 %v973, %v1128
    %v1130 = vpop.f32.mrb[0].mxu0
    %v1131 = vpop.f32.mrb[0].mxu0
    %v1132 = vadd.f32 %v978, %v1131
    %v1133 = vpop.f32.mrb[0].mxu0
    %1134 = vmatprep.mubr.bf16.mxu0 0
    %1135 = vmatmul.mubr.bf16.gmra.mrb[0].mxu0 %v1065
    %v1136 = vpop.f32.mrb[0].mxu0
    %v1137 = vadd.f32 %v983, %v1136
    %v1138 = vpop.f32.mrb[0].mxu0
    %v1139 = vpop.f32.mrb[0].mxu0
    %v1140 = vadd.f32 %v988, %v1139
    %v1141 = vpop.f32.mrb[0].mxu0
    %1142 = vmatprep.mubr.bf16.mxu0 0
    %1143 = vmatmul.mubr.bf16.gmra.mrb[0].mxu0 %v1066
    %v1144 = vpop.f32.mrb[0].mxu0
    %v1145 = vadd.f32 %v993, %v1144
    %v1146 = vpop.f32.mrb[0].mxu0
    %v1147 = vpop.f32.mrb[0].mxu0
    %v1148 = vadd.f32 %v998, %v1147
    %v1149 = vpop.f32.mrb[0].mxu0
    %1150 = vmatprep.mubr.bf16.mxu0 0
    %1151 = vmatmul.mubr.bf16.gmra.mrb[0].mxu0 %v1067
    %v1152 = vpop.f32.mrb[0].mxu0
    %v1153 = vadd.f32 %v1003, %v1152
    %v1154 = vpop.f32.mrb[0].mxu0
    %v1155 = vpop.f32.mrb[0].mxu0
    %v1156 = vadd.f32 %v1008, %v1155
    %v1157 = vpop.f32.mrb[0].mxu0
    %1158 = vmatprep.mubr.bf16.mxu0 0
    %1159 = vmatmul.mubr.bf16.gmra.mrb[0].mxu0 %v1068
    %v1160 = vpop.f32.mrb[0].mxu0
    %v1161 = vadd.f32 %v1013, %v1160
    %v1162 = vpop.f32.mrb[0].mxu0
    %v1163 = vpop.f32.mrb[0].mxu0
    %v1164 = vadd.f32 %v1018, %v1163
    %v1165 = vpop.f32.mrb[0].mxu0
    %1166 = vmatprep.mubr.bf16.mxu0 0
    %1167 = vmatmul.mubr.bf16.gmra.mrb[0].mxu0 %v1069
    %v1168 = vpop.f32.mrb[0].mxu0
    %v1169 = vadd.f32 %v1023, %v1168
    %v1170 = vpop.f32.mrb[0].mxu0
    %v1171 = vpop.f32.mrb[0].mxu0
    %v1172 = vadd.f32 %v1028, %v1171
    %v1173 = vpop.f32.mrb[0].mxu0
    %1174 = vdwg.mxu0
    %v1175 = vmax.f32 %v1113, 0.0
    %v1176 = vmax.f32 %v1116, 0.0
    %v1177 = vmax.f32 %v1121, 0.0
    %v1178 = vmax.f32 %v1124, 0.0
    %v1179 = vmax.f32 %v1129, 0.0
    %v1180 = vmax.f32 %v1132, 0.0
    %v1181 = vmax.f32 %v1137, 0.0
    %v1182 = vmax.f32 %v1140, 0.0
    %v1183 = vmax.f32 %v1145, 0.0
    %v1184 = vmax.f32 %v1148, 0.0
    %v1185 = vmax.f32 %v1153, 0.0
    %v1186 = vmax.f32 %v1156, 0.0
    %v1187 = vmax.f32 %v1161, 0.0
    %v1188 = vmax.f32 %v1164, 0.0
    %v1189 = vmax.f32 %v1169, 0.0
    %v1190 = vmax.f32 %v1172, 0.0
    %v1191 = vld [vmem:[%s9] sm:$0xf]
    %v1192 = vld [vmem:[%s9 + $0x4] sm:$0xf]
    %v1193 = vld [vmem:[%s9 + $0x8] sm:$0xf]
    %v1194 = vld [vmem:[%s9 + $0xc] sm:$0xf]
    %v1195 = vld [vmem:[%s9 + $0x10] sm:$0xf]
    %v1196 = vld [vmem:[%s9 + $0x14] sm:$0xf]
    %v1197 = vld [vmem:[%s9 + $0x18] sm:$0xf]
    %v1198 = vld [vmem:[%s9 + $0x1c] sm:$0xf]
    %v1199 = vld [vmem:[%s9 + $0x20] sm:$0xf]
    %v1200 = vld [vmem:[%s9 + $0x24] sm:$0xf]
    %v1201 = vld [vmem:[%s9 + $0x28] sm:$0xf]
    %v1202 = vld [vmem:[%s9 + $0x2c] sm:$0xf]
    %v1203 = vld [vmem:[%s9 + $0x30] sm:$0xf]
    %v1204 = vld [vmem:[%s9 + $0x34] sm:$0xf]
    %v1205 = vld [vmem:[%s9 + $0x38] sm:$0xf]
    %v1206 = vld [vmem:[%s9 + $0x3c] sm:$0xf]
    %v1207 = vld [vmem:[#allocation2] sm:$0x1]
    %v1208 = vunpack.c.l.bf16 %v1191
    %v1209 = vunpack.c.l.bf16 %v1192
    %v1210 = vunpack.c.l.bf16 %v1193
    %v1211 = vunpack.c.l.bf16 %v1194
    %v1212 = vunpack.c.l.bf16 %v1195
    %v1213 = vunpack.c.l.bf16 %v1196
    %v1214 = vunpack.c.l.bf16 %v1197
    %v1215 = vunpack.c.l.bf16 %v1198
    %v1216 = vunpack.c.l.bf16 %v1199
    %v1217 = vunpack.c.l.bf16 %v1200
    %v1218 = vunpack.c.l.bf16 %v1201
    %v1219 = vunpack.c.l.bf16 %v1202
    %v1220 = vunpack.c.l.bf16 %v1203
    %v1221 = vunpack.c.l.bf16 %v1204
    %v1222 = vunpack.c.l.bf16 %v1205
    %v1223 = vunpack.c.l.bf16 %v1206
    %1225 = vset.pattern.permute.xlu0 0
    %1226 = vperm.xlu0 %1225, %v1208
    %v1227 = vpop.permute.xlu0 %1226
    %1230 = vset.pattern.permute.xlu0 0
    %1231 = vperm.xlu0 %1230, %v1209
    %v1232 = vpop.permute.xlu0 %1231
    %1235 = vset.pattern.permute.xlu0 0
    %1236 = vperm.xlu0 %1235, %v1210
    %v1237 = vpop.permute.xlu0 %1236
    %1240 = vset.pattern.permute.xlu0 0
    %1241 = vperm.xlu0 %1240, %v1211
    %v1242 = vpop.permute.xlu0 %1241
    %1245 = vset.pattern.permute.xlu0 0
    %1246 = vperm.xlu0 %1245, %v1212
    %v1247 = vpop.permute.xlu0 %1246
    %1250 = vset.pattern.permute.xlu0 0
    %1251 = vperm.xlu0 %1250, %v1213
    %v1252 = vpop.permute.xlu0 %1251
    %1255 = vset.pattern.permute.xlu0 0
    %1256 = vperm.xlu0 %1255, %v1214
    %v1257 = vpop.permute.xlu0 %1256
    %1260 = vset.pattern.permute.xlu0 0
    %1261 = vperm.xlu0 %1260, %v1215
    %v1262 = vpop.permute.xlu0 %1261
    %1265 = vset.pattern.permute.xlu0 0
    %1266 = vperm.xlu0 %1265, %v1216
    %v1267 = vpop.permute.xlu0 %1266
    %1270 = vset.pattern.permute.xlu0 0
    %1271 = vperm.xlu0 %1270, %v1217
    %v1272 = vpop.permute.xlu0 %1271
    %1275 = vset.pattern.permute.xlu0 0
    %1276 = vperm.xlu0 %1275, %v1218
    %v1277 = vpop.permute.xlu0 %1276
    %1280 = vset.pattern.permute.xlu0 0
    %1281 = vperm.xlu0 %1280, %v1219
    %v1282 = vpop.permute.xlu0 %1281
    %1285 = vset.pattern.permute.xlu0 0
    %1286 = vperm.xlu0 %1285, %v1220
    %v1287 = vpop.permute.xlu0 %1286
    %1290 = vset.pattern.permute.xlu0 0
    %1291 = vperm.xlu0 %1290, %v1221
    %v1292 = vpop.permute.xlu0 %1291
    %1295 = vset.pattern.permute.xlu0 0
    %1296 = vperm.xlu0 %1295, %v1222
    %v1297 = vpop.permute.xlu0 %1296
    %1300 = vset.pattern.permute.xlu0 0
    %1301 = vperm.xlu0 %1300, %v1223
    %v1302 = vpop.permute.xlu0 %1301
    %v1304 = vmul.f32 %v1175, %v1227
    %v1305 = vmul.f32 %v1176, %v1232
    %v1306 = vmul.f32 %v1177, %v1237
    %v1307 = vmul.f32 %v1178, %v1242
    %v1308 = vmul.f32 %v1179, %v1247
    %v1309 = vmul.f32 %v1180, %v1252
    %v1310 = vmul.f32 %v1181, %v1257
    %v1311 = vmul.f32 %v1182, %v1262
    %v1312 = vmul.f32 %v1183, %v1267
    %v1313 = vmul.f32 %v1184, %v1272
    %v1314 = vmul.f32 %v1185, %v1277
    %v1315 = vmul.f32 %v1186, %v1282
    %v1316 = vmul.f32 %v1187, %v1287
    %v1317 = vmul.f32 %v1188, %v1292
    %v1318 = vmul.f32 %v1189, %v1297
    %v1319 = vmul.f32 %v1190, %v1302
    %v1320 = vadd.f32 %v1304, %v1305
    %v1321 = vadd.f32 %v1320, %v1306
    %v1322 = vadd.f32 %v1321, %v1307
    %v1323 = vadd.f32 %v1322, %v1308
    %v1324 = vadd.f32 %v1323, %v1309
    %v1325 = vadd.f32 %v1324, %v1310
    %v1326 = vadd.f32 %v1325, %v1311
    %v1327 = vadd.f32 %v1326, %v1312
    %v1328 = vadd.f32 %v1327, %v1313
    %v1329 = vadd.f32 %v1328, %v1314
    %v1330 = vadd.f32 %v1329, %v1315
    %v1331 = vadd.f32 %v1330, %v1316
    %v1332 = vadd.f32 %v1331, %v1317
    %v1333 = vadd.f32 %v1332, %v1318
    %v1334 = vadd.f32 %v1333, %v1319
    %v1335 = vrot.slane %v1334, 4
    %v1336 = vadd.f32 %v1334, %v1335
    %v1337 = vrot.slane %v1336, 2
    %v1338 = vadd.f32 %v1336, %v1337
    %v1339 = vrot.slane %v1338, 1
    %v1340 = vadd.f32 %v1338, %v1339
    %1342 = vset.pattern.permute.xlu0 0
    %1343 = vperm.xlu0 %1342, %v1207
    %v1344 = vpop.permute.xlu0 %1343
    %v1346 = vlaneseq
    %v1347 = vshrl.u32 %v1346, 7
    %v1348 = vsub.s32 0, %v1347
    %v1349 = vrot.slane %v1344, %v1348
    %v1350 = vadd.f32 %v1340, %v1349
    %1351 = vst [vmem:[#allocation3] sm:$0x1] %v1350
    // Predicated region
    $region46: #{tpu_custom_call.1} parent=1 // pred_check
      _
    $region47: #{tpu_custom_call.1} parent=1 // pred_check_branch
      %1353 = sbr.rel (0) target = $region49
    $region48: #{tpu_custom_call.1} parent=1 // pred_region
      %s1355 = ssub.s32 16, 16
      %1356 = vsyncadd [#allocation4], %s1355
      %s1358 = sshll.u32 [#allocation3], 4
      %s1359 = int_to_ptr.vmem [resolvable:$true] %s1358
      %1361 = dma.vmem_to_hbm [thread:$0]  %s1359, 16, %s11, [#allocation4]
    $region49: #{tpu_custom_call.1} parent=1 // pred_fallthru
      _
    // Predicated region
    $region50: #{tpu_custom_call.1} parent=1 // pred_check
      _
    $region51: #{tpu_custom_call.1} parent=1 // pred_check_branch
      %1363 = sbr.rel (0) target = $region53
    $region52: #{tpu_custom_call.1} parent=1 // pred_region
      %1364 = dma.done [#allocation4], 16
    $region53: #{tpu_custom_call.1} parent=1 // pred_fallthru
      _
    %1365 = vsyncpa [#allocation4], 1

</llo_original>
